<compile_context>
chip_gen: v6e
topology: v6e:2x2x1
jax: 0.10.0
libtpu: 0.0.40
codegen_flags: <defaults>
</compile_context>

<pallas_src>
import functools
import math

import jax
import jax.numpy as jnp
import numpy as np
from jax.experimental import pallas as pl
from jax.experimental.pallas import tpu as pltpu


def dequan_kernel(x_ref, w_ref, b_ref, a_ref, o_ref, *, eps=1e-5):
    # x_ref: [bt, D] f32    w_ref: [D, F] bf16  (= W_cat @ (I - A))
    # b_ref: [1, F]  f32    a_ref: [F, F] bf16  (block-diag averaging matrix A)
    # o_ref: [bt, F] bf16
    x = x_ref[...]

    # --- LayerNorm over the full D-wide feature dim (f32) ---
    mu = jnp.mean(x, axis=-1, keepdims=True)
    var = jnp.mean((x - mu) ** 2, axis=-1, keepdims=True)
    xn = (x - mu) * jax.lax.rsqrt(var + eps)

    # --- one MXU matmul: segment Linears + stack + second-LN mean removal ---
    y_c = jnp.dot(xn.astype(w_ref.dtype), w_ref[...],
                  preferred_element_type=jnp.float32) + b_ref[...]      # [bt, F]

    # --- per-segment variance, broadcast back across each d-wide segment ---
    # (y_c*y_c) @ A keeps everything lane-dense; tiny matmul on an idle MXU
    # (replaces the [bt, n, d] reshape + masked cross-lane reductions).
    var2 = jnp.dot((y_c * y_c).astype(a_ref.dtype), a_ref[...],
                   preferred_element_type=jnp.float32)                  # [bt, F]

    o_ref[...] = (y_c * jax.lax.rsqrt(var2 + eps)).astype(o_ref.dtype)


def _round_up(x, m):
    return (x + m - 1) // m * m


def _choose_bt(B, bt):
    """Clamp the batch tile: multiple of 8, and >= 2 grid steps when B allows."""
    bt = max(8, min(bt, _round_up(B, 8)))
    if B > 8:
        bt = min(bt, _round_up(pl.cdiv(B, 2), 8))   # >= 2 steps -> v7x megacore
    return bt


def dequan_forward(x, w_cat, b_cat, a_blk, *, n, d, bt=512,
                   out_dtype=jnp.bfloat16, eps=1e-5):
    """x: [B, D] f32 -> [B, n, d] out_dtype (default bf16; kernel is HBM-bound)."""
    B, D = x.shape
    F = n * d
    bt = _choose_bt(B, bt)
    grid0 = pl.cdiv(B, bt)
    Bp = grid0 * bt
    if Bp != B:
        x = jnp.pad(x, ((0, Bp - B), (0, 0)))       # padded rows discarded below

    kernel = functools.partial(dequan_kernel, eps=eps)
    out2d = pl.pallas_call(
        kernel,
        out_shape=jax.ShapeDtypeStruct((Bp, F), out_dtype),
        grid=(grid0,),
        in_specs=[
            pl.BlockSpec((bt, D), lambda i: (i, 0)),   # x tile (bt batch rows)
            pl.BlockSpec((D, F), lambda i: (0, 0)),    # combined weight (resident)
            pl.BlockSpec((1, F), lambda i: (0, 0)),    # combined bias   (resident)
            pl.BlockSpec((F, F), lambda i: (0, 0)),    # averaging matrix (resident)
        ],
        out_specs=pl.BlockSpec((bt, F), lambda i: (i, 0)),
        compiler_params=pltpu.CompilerParams(
            dimension_semantics=("parallel",)),
    )(x, w_cat, b_cat, a_blk)
    # Layout plumbing outside the kernel: drop padding, reshape to [B, n, d].
    return out2d[:B].reshape(B, n, d)


def build_combined_params(weights, biases, dim_list, d):
    """Glue: fold segment Linears + stack + second-LN mean-centering into one matmul.

    weights[i]: [d, dim_i] (torch Linear convention, out x in), biases[i]: [d].
    Returns W_cat' [D, n*d] bf16, b_cat' [1, n*d] f32, A [n*d, n*d] bf16.
    """
    D = int(sum(dim_list))
    n = len(dim_list)
    F = n * d
    w_cat = np.zeros((D, F), np.float32)
    s = 0
    for i, (dim_i, w) in enumerate(zip(dim_list, weights)):
        w_cat[s:s + dim_i, i * d:(i + 1) * d] = np.asarray(w).T
        s += dim_i
    b_cat = np.concatenate([np.asarray(b) for b in biases]).reshape(1, F)
    # Block-diagonal per-segment averaging matrix A; right-multiplying by (I - A)
    # removes each d-wide segment's mean (the second LayerNorm's centering step).
    a_blk = np.zeros((F, F), np.float32)
    for i in range(n):
        a_blk[i * d:(i + 1) * d, i * d:(i + 1) * d] = 1.0 / d
    proj = np.eye(F, dtype=np.float32) - a_blk
    return (jnp.asarray(w_cat @ proj, jnp.bfloat16),
            jnp.asarray(b_cat @ proj, jnp.float32),
            jnp.asarray(a_blk, jnp.bfloat16))


def dequan_reference(x, weights, biases, dim_list, eps=1e-5):
    """Pure-JAX (f32) replica of the PyTorch eval forward, for correctness checks."""
    mu = jnp.mean(x, axis=-1, keepdims=True)
    var = jnp.mean((x - mu) ** 2, axis=-1, keepdims=True)
    xn = (x - mu) / jnp.sqrt(var + eps)
    outs, s = [], 0
    for dim_i, w, b in zip(dim_list, weights, biases):
        outs.append(xn[:, s:s + dim_i] @ w.T + b)
        s += dim_i
    y = jnp.stack(outs, axis=1)                                  # [B, n, d]
    mu2 = jnp.mean(y, axis=-1, keepdims=True)
    var2 = jnp.mean((y - mu2) ** 2, axis=-1, keepdims=True)
    return (y - mu2) / jnp.sqrt(var2 + eps)


if __name__ == "__main__":
    # Shapes implied by the module: x is [B, sum(dim_list)] = [B, 120];
    # output is [B, len(dim_list), d].  d=32 -> n*d = 128 (lane-dense output).
    dim_list = [35, 32, 28, 25]
    D = sum(dim_list)                     # 120
    n = len(dim_list)                     # 4
    d = 32

    key = jax.random.PRNGKey(0)
    keys = jax.random.split(key, 2 * n + 1)

    # PyTorch nn.Linear default init: U(-1/sqrt(fan_in), 1/sqrt(fan_in)).
    weights, biases = [], []
    for i, dim_i in enumerate(dim_list):
        bound = 1.0 / math.sqrt(dim_i)
        weights.append(jax.random.uniform(keys[2 * i], (d, dim_i), jnp.float32,
                                          minval=-bound, maxval=bound))
        biases.append(jax.random.uniform(keys[2 * i + 1], (d,), jnp.float32,
                                         minval=-bound, maxval=bound))

    w_cat, b_cat, a_blk = build_combined_params(weights, biases, dim_list, d)

    # Case 1: batch divisible by the chosen tile (2 grid steps of 128 rows).
    B1 = 256
    x1 = jax.random.normal(keys[-1], (B1, D), jnp.float32)
    out1 = jax.block_until_ready(dequan_forward(x1, w_cat, b_cat, a_blk, n=n, d=d))
    ref1 = dequan_reference(x1, weights, biases, dim_list)
    np.testing.assert_allclose(np.asarray(out1, np.float32), np.asarray(ref1),
                               rtol=3e-2, atol=3e-2)

    # Case 2: ragged batch -> cdiv grid + zero-padded last tile.
    B2 = 100
    x2 = jax.random.normal(jax.random.PRNGKey(1), (B2, D), jnp.float32)
    out2 = jax.block_until_ready(dequan_forward(x2, w_cat, b_cat, a_blk, n=n, d=d))
    ref2 = dequan_reference(x2, weights, biases, dim_list)
    np.testing.assert_allclose(np.asarray(out2, np.float32), np.asarray(ref2),
                               rtol=3e-2, atol=3e-2)

    print("KERNEL_OK")
</pallas_src>

<mosaic_0001>
module attributes {stable_mosaic.version = 11 : i64} {
  func.func @dequan_kernel(%arg0: i32, %arg1: memref<128x120xf32, #tpu.memory_space<vmem>>, %arg2: memref<120x128xbf16, #tpu.memory_space<vmem>>, %arg3: memref<1x128xf32, #tpu.memory_space<vmem>>, %arg4: memref<128x128xbf16, #tpu.memory_space<vmem>>, %arg5: memref<128x128xbf16, #tpu.memory_space<vmem>>) attributes {dimension_semantics = [#tpu.dimension_semantics<parallel>], iteration_bounds = array<i64: 2>, scalar_prefetch = 0 : i64, scratch_operands = 0 : i64, tpu.core_type = #tpu.core_type<tc>, window_params = [{transform_indices = @transform_0, window_bounds = array<i64: 128, 120>}, {pipeline_mode = #tpu.pipeline_mode<synchronous>, transform_indices = @transform_1, window_bounds = array<i64: 120, 128>}, {pipeline_mode = #tpu.pipeline_mode<synchronous>, transform_indices = @transform_2, window_bounds = array<i64: 1, 128>}, {pipeline_mode = #tpu.pipeline_mode<synchronous>, transform_indices = @transform_3, window_bounds = array<i64: 128, 128>}, {transform_indices = @transform_4, window_bounds = array<i64: 128, 128>}]} {
    %c0 = arith.constant 0 : index
    %c0_0 = arith.constant 0 : index
    %0 = vector.load %arg1[%c0, %c0_0] : memref<128x120xf32, #tpu.memory_space<vmem>>, vector<128x120xf32>
    %cst = arith.constant dense<0.000000e+00> : vector<128xf32>
    %1 = vector.multi_reduction <add>, %0, %cst [1] : vector<128x120xf32> to vector<128xf32>
    %2 = vector.shape_cast %1 : vector<128xf32> to vector<128x1xf32>
    %cst_1 = arith.constant 1.200000e+02 : f32
    %3 = vector.broadcast %cst_1 : f32 to vector<128x1xf32>
    %4 = arith.divf %2, %3 : vector<128x1xf32>
    %5 = vector.broadcast %4 : vector<128x1xf32> to vector<128x120xf32>
    %6 = arith.subf %0, %5 : vector<128x120xf32>
    %7 = arith.mulf %6, %6 : vector<128x120xf32>
    %cst_2 = arith.constant dense<0.000000e+00> : vector<128xf32>
    %8 = vector.multi_reduction <add>, %7, %cst_2 [1] : vector<128x120xf32> to vector<128xf32>
    %9 = vector.shape_cast %8 : vector<128xf32> to vector<128x1xf32>
    %cst_3 = arith.constant 1.200000e+02 : f32
    %10 = vector.broadcast %cst_3 : f32 to vector<128x1xf32>
    %11 = arith.divf %9, %10 : vector<128x1xf32>
    %12 = vector.broadcast %4 : vector<128x1xf32> to vector<128x120xf32>
    %13 = arith.subf %0, %12 : vector<128x120xf32>
    %cst_4 = arith.constant 9.99999974E-6 : f32
    %14 = vector.broadcast %cst_4 : f32 to vector<128x1xf32>
    %15 = arith.addf %11, %14 : vector<128x1xf32>
    %16 = math.rsqrt %15 : vector<128x1xf32>
    %17 = vector.broadcast %16 : vector<128x1xf32> to vector<128x120xf32>
    %18 = arith.mulf %13, %17 : vector<128x120xf32>
    %19 = arith.truncf %18 : vector<128x120xf32> to vector<128x120xbf16>
    %c0_5 = arith.constant 0 : index
    %c0_6 = arith.constant 0 : index
    %20 = vector.load %arg2[%c0_5, %c0_6] : memref<120x128xbf16, #tpu.memory_space<vmem>>, vector<120x128xbf16>
    %cst_7 = arith.constant dense<0.000000e+00> : vector<128x128xf32>
    %21 = tpu.matmul %19, %20, %cst_7 {dimension_numbers = #tpu.dot_dimension_numbers<[1], [0], [0], [1], [0, 0, 1, 1], [], []>} : vector<128x120xbf16>, vector<120x128xbf16>, vector<128x128xf32> -> vector<128x128xf32>
    %c0_8 = arith.constant 0 : index
    %c0_9 = arith.constant 0 : index
    %22 = vector.load %arg3[%c0_8, %c0_9] : memref<1x128xf32, #tpu.memory_space<vmem>>, vector<1x128xf32>
    %23 = vector.broadcast %22 : vector<1x128xf32> to vector<128x128xf32>
    %24 = arith.addf %21, %23 : vector<128x128xf32>
    %25 = arith.mulf %24, %24 : vector<128x128xf32>
    %26 = arith.truncf %25 : vector<128x128xf32> to vector<128x128xbf16>
    %c0_10 = arith.constant 0 : index
    %c0_11 = arith.constant 0 : index
    %27 = vector.load %arg4[%c0_10, %c0_11] : memref<128x128xbf16, #tpu.memory_space<vmem>>, vector<128x128xbf16>
    %cst_12 = arith.constant dense<0.000000e+00> : vector<128x128xf32>
    %28 = tpu.matmul %26, %27, %cst_12 {dimension_numbers = #tpu.dot_dimension_numbers<[1], [0], [0], [1], [0, 0, 1, 1], [], []>} : vector<128x128xbf16>, vector<128x128xbf16>, vector<128x128xf32> -> vector<128x128xf32>
    %cst_13 = arith.constant 9.99999974E-6 : f32
    %29 = vector.broadcast %cst_13 : f32 to vector<128x128xf32>
    %30 = arith.addf %28, %29 : vector<128x128xf32>
    %31 = math.rsqrt %30 : vector<128x128xf32>
    %32 = arith.mulf %24, %31 : vector<128x128xf32>
    %33 = arith.truncf %32 : vector<128x128xf32> to vector<128x128xbf16>
    %c0_14 = arith.constant 0 : index
    %c0_15 = arith.constant 0 : index
    %34 = vector.load %arg5[%c0_14, %c0_15] : memref<128x128xbf16, #tpu.memory_space<vmem>>, vector<128x128xbf16>
    tpu.vector_store %arg5[%c0_14, %c0_15], %33 {strides = array<i32>} : memref<128x128xbf16, #tpu.memory_space<vmem>>, vector<128x128xbf16>,
    return
  }
  func.func @transform_0(%arg0: i32) -> (i32, i32) {
    %c0_i32 = arith.constant 0 : i32
    %c0_i32_0 = arith.constant 0 : i32
    return %arg0, %c0_i32 : i32, i32
  }
  func.func @transform_1(%arg0: i32) -> (i32, i32) {
    %c0_i32 = arith.constant 0 : i32
    %c0_i32_0 = arith.constant 0 : i32
    %c0_i32_1 = arith.constant 0 : i32
    return %c0_i32, %c0_i32_0 : i32, i32
  }
  func.func @transform_2(%arg0: i32) -> (i32, i32) {
    %c0_i32 = arith.constant 0 : i32
    %c0_i32_0 = arith.constant 0 : i32
    %c0_i32_1 = arith.constant 0 : i32
    return %c0_i32, %c0_i32_0 : i32, i32
  }
  func.func @transform_3(%arg0: i32) -> (i32, i32) {
    %c0_i32 = arith.constant 0 : i32
    %c0_i32_0 = arith.constant 0 : i32
    %c0_i32_1 = arith.constant 0 : i32
    return %c0_i32, %c0_i32_0 : i32, i32
  }
  func.func @transform_4(%arg0: i32) -> (i32, i32) {
    %c0_i32 = arith.constant 0 : i32
    %c0_i32_0 = arith.constant 0 : i32
    return %arg0, %c0_i32 : i32, i32
  }
}

</mosaic_0001>

<llo_original>
// kernel: tpu_custom_call.1
$region0: #{tpu_custom_call.1}
  #allocation0 [shape = 'u32[]', space=smem, size = 0x4, offset = 0x4, fixed_abs, tag = 'smem constant byte address 0x4 - core index']
  #allocation1 [shape = 'u32[144,128]{1,0:T(1,128)}', space=vmem, size = 0x12000, scoped, tag = 'internal scratch']
  %s0 = inlined_call_operand.vmem [shape: f32[256,120], index: 0, kind: input, shape index: {}]
  %s1 = inlined_call_operand.vmem [shape: bf16[120,128], index: 1, kind: input, shape index: {}]
  %s2 = inlined_call_operand.vmem [shape: f32[1,128], index: 2, kind: input, shape index: {}]
  %s3 = inlined_call_operand.vmem [shape: bf16[128,128], index: 3, kind: input, shape index: {}]
  %s4 = inlined_call_operand.hbm [shape: bf16[256,128], index: 4, kind: output, shape index: {}]
  %s5 = sld [smem:[#allocation0]]
  $region49: #{tpu_custom_call.1} parent=0
    _
  %s7 = ssub.s32 1, %s5
  %s8 = scalar_select 0, %s7, %s5
  $region1: #{tpu_custom_call.1} parent=0
    #allocation2 [shape = 'u8[65536]{0}', space=vmem, size = 0x10000, scoped, tag = 'output window, operand 0']
    #allocation3 [shape = 's32[2]{0}', space=sflag, size = 0x8, scoped, tag = 'scoped memory for tpu_custom_call.1']
    %9 = vsyncpa [#allocation3], 0
    %s10 = scalar_lea.sflag [#allocation3], 1
    %11 = vsyncpa %s10, 0
    loop: start=0, step=1, limit=4
    $region2: #{tpu_custom_call.1} parent=1 // loop_pre_header
      _
    $region3: #{tpu_custom_call.1} parent=1 // loop_header
      %s13 = sphi 0, %s17
      %p14 = scmp.ge.s32.totalorder %s13, 4
      %s23 = sphi 0, %s25
      %s26 = sphi 0, %s23
      %s27 = sphi 0, %s26
      %s43 = sphi 0, %s27
      %s47 = sphi 0, %s47
      %s49 = sphi 0, %s47
      %s50 = sphi 0, %s49
      %s64 = sphi 0, %s50
      %s68 = sphi 0, %s68
      %s70 = sphi 0, %s68
      %s71 = sphi 0, %s70
      %s85 = sphi 0, %s71
      %s89 = sphi 0, %s89
      %s91 = sphi 0, %s89
      %s92 = sphi 0, %s91
      %s106 = sphi 0, %s92
      %s112 = sphi 0, %s114
      %s115 = sphi 0, %s112
      %s116 = sphi 0, %s115
      %s132 = sphi 0, %s116
    $region4: #{tpu_custom_call.1} parent=1 // loop_header_branch
      %16 = sbr.rel (%p14) target = $region8
    $region5: #{tpu_custom_call.1} parent=1 // loop_body
      %s18 = ssub.s32 %s13, 1
      %s19 = ssub.s32 %s13, 2
      %s20 = sadd.s32 %s13, 1
      %s21 = ssub.s32 %s13, %s20
      %p22 = scmp.eq.s32.totalorder %s21, 0
      %s24 = sadd.s32 %s23, 1
      %s25 = scalar_select %p22, %s23, %s24
      %p28 = pneg %p22
      %p29 = scmp.eq.s32.totalorder %s13, 1
      %p30 = por %p28, %p29
      %p31 = scmp.ne.s32.totalorder %s23, %s26
      %p32 = scmp.eq.s32.totalorder %s13, 0
      %p33 = por %p31, %p32
      %p34 = scmp.ne.s32.totalorder %s23, %s26
      %p35 = scmp.eq.s32.totalorder %s18, 1
      %p36 = por %p34, %p35
      %p37 = scmp.ne.s32.totalorder %s26, %s27
      %p38 = scmp.eq.s32.totalorder %s18, 0
      %p39 = por %p37, %p38
      %p40 = scmp.ne.s32.totalorder %s26, %s27
      %p41 = scmp.eq.s32.totalorder %s19, 1
      %p42 = por %p40, %p41
      %p44 = scmp.ne.s32.totalorder %s27, %s43
      %p45 = scmp.eq.s32.totalorder %s19, 0
      %p46 = por %p44, %p45
      %s48 = sadd.s32 %s47, 1
      %p51 = scmp.eq.s32.totalorder %s13, 1
      %p52 = scmp.ne.s32.totalorder %s47, %s49
      %p53 = scmp.eq.s32.totalorder %s13, 0
      %p54 = por %p52, %p53
      %p55 = scmp.ne.s32.totalorder %s47, %s49
      %p56 = scmp.eq.s32.totalorder %s18, 1
      %p57 = por %p55, %p56
      %p58 = scmp.ne.s32.totalorder %s49, %s50
      %p59 = scmp.eq.s32.totalorder %s18, 0
      %p60 = por %p58, %p59
      %p61 = scmp.ne.s32.totalorder %s49, %s50
      %p62 = scmp.eq.s32.totalorder %s19, 1
      %p63 = por %p61, %p62
      %p65 = scmp.ne.s32.totalorder %s50, %s64
      %p66 = scmp.eq.s32.totalorder %s19, 0
      %p67 = por %p65, %p66
      %s69 = sadd.s32 %s68, 1
      %p72 = scmp.eq.s32.totalorder %s13, 1
      %p73 = scmp.ne.s32.totalorder %s68, %s70
      %p74 = scmp.eq.s32.totalorder %s13, 0
      %p75 = por %p73, %p74
      %p76 = scmp.ne.s32.totalorder %s68, %s70
      %p77 = scmp.eq.s32.totalorder %s18, 1
      %p78 = por %p76, %p77
      %p79 = scmp.ne.s32.totalorder %s70, %s71
      %p80 = scmp.eq.s32.totalorder %s18, 0
      %p81 = por %p79, %p80
      %p82 = scmp.ne.s32.totalorder %s70, %s71
      %p83 = scmp.eq.s32.totalorder %s19, 1
      %p84 = por %p82, %p83
      %p86 = scmp.ne.s32.totalorder %s71, %s85
      %p87 = scmp.eq.s32.totalorder %s19, 0
      %p88 = por %p86, %p87
      %s90 = sadd.s32 %s89, 1
      %p93 = scmp.eq.s32.totalorder %s13, 1
      %p94 = scmp.ne.s32.totalorder %s89, %s91
      %p95 = scmp.eq.s32.totalorder %s13, 0
      %p96 = por %p94, %p95
      %p97 = scmp.ne.s32.totalorder %s89, %s91
      %p98 = scmp.eq.s32.totalorder %s18, 1
      %p99 = por %p97, %p98
      %p100 = scmp.ne.s32.totalorder %s91, %s92
      %p101 = scmp.eq.s32.totalorder %s18, 0
      %p102 = por %p100, %p101
      %p103 = scmp.ne.s32.totalorder %s91, %s92
      %p104 = scmp.eq.s32.totalorder %s19, 1
      %p105 = por %p103, %p104
      %p107 = scmp.ne.s32.totalorder %s92, %s106
      %p108 = scmp.eq.s32.totalorder %s19, 0
      %p109 = por %p107, %p108
      %s110 = ssub.s32 %s13, %s20
      %p111 = scmp.eq.s32.totalorder %s110, 0
      %s113 = sadd.s32 %s112, 1
      %s114 = scalar_select %p111, %s112, %s113
      %p117 = pneg %p111
      %p118 = scmp.eq.s32.totalorder %s13, 1
      %p119 = por %p117, %p118
      %p120 = scmp.ne.s32.totalorder %s112, %s115
      %p121 = scmp.eq.s32.totalorder %s13, 0
      %p122 = por %p120, %p121
      %p123 = scmp.ne.s32.totalorder %s112, %s115
      %p124 = scmp.eq.s32.totalorder %s18, 1
      %p125 = por %p123, %p124
      %p126 = scmp.ne.s32.totalorder %s115, %s116
      %p127 = scmp.eq.s32.totalorder %s18, 0
      %p128 = por %p126, %p127
      %p129 = scmp.ne.s32.totalorder %s115, %s116
      %p130 = scmp.eq.s32.totalorder %s19, 1
      %p131 = por %p129, %p130
      %p133 = scmp.ne.s32.totalorder %s116, %s132
      %p134 = scmp.eq.s32.totalorder %s19, 0
      %p135 = por %p133, %p134
      %p136 = scmp.le.s32.totalorder 1, %s13
      %p137 = scmp.lt.s32.totalorder %s13, 3
      %p138 = pnand %p136, %p137
      %p139 = pneg %p138
      // Predicated region
      $region9: #{tpu_custom_call.1} parent=5 // pred_check
        _
      $region10: #{tpu_custom_call.1} parent=5 // pred_check_branch
        %141 = sbr.rel (%p138) target = $region12
      $region11: #{tpu_custom_call.1} parent=5 // pred_region
        %s142 = ssub.s32 %s13, 1
        // Predicated region
        $region13: #{tpu_custom_call.1} parent=11 // pred_check
          %p143 = pneg %p60
        $region14: #{tpu_custom_call.1} parent=11 // pred_check_branch
          %145 = sbr.rel (%p143) target = $region16
        $region15: #{tpu_custom_call.1} parent=11 // pred_region
          _
        $region16: #{tpu_custom_call.1} parent=11 // pred_fallthru
          _
        // Predicated region
        $region17: #{tpu_custom_call.1} parent=11 // pred_check
          %p146 = pneg %p81
        $region18: #{tpu_custom_call.1} parent=11 // pred_check_branch
          %148 = sbr.rel (%p146) target = $region20
        $region19: #{tpu_custom_call.1} parent=11 // pred_region
          _
        $region20: #{tpu_custom_call.1} parent=11 // pred_fallthru
          _
        // Predicated region
        $region21: #{tpu_custom_call.1} parent=11 // pred_check
          %p149 = pneg %p102
        $region22: #{tpu_custom_call.1} parent=11 // pred_check_branch
          %151 = sbr.rel (%p149) target = $region24
        $region23: #{tpu_custom_call.1} parent=11 // pred_region
          _
        $region24: #{tpu_custom_call.1} parent=11 // pred_fallthru
          _
      $region12: #{tpu_custom_call.1} parent=5 // pred_fallthru
        _
      %p152 = scmp.lt.s32.totalorder %s13, 2
      // Predicated region
      $region25: #{tpu_custom_call.1} parent=5 // pred_check
        %p153 = pneg %p152
      $region26: #{tpu_custom_call.1} parent=5 // pred_check_branch
        %155 = sbr.rel (%p153) target = $region28
      $region27: #{tpu_custom_call.1} parent=5 // pred_region
        // Predicated region
        $region29: #{tpu_custom_call.1} parent=27 // pred_check
          %p156 = pneg %p33
        $region30: #{tpu_custom_call.1} parent=27 // pred_check_branch
          %158 = sbr.rel (%p156) target = $region32
        $region31: #{tpu_custom_call.1} parent=27 // pred_region
          %s159 = smul.u32 16, %s13
          %p160 = scmp.lt.s32.totalorder %s159, 31
          %s161 = scalar_select %p160, %s159, 31
          %s162 = smul.addr %s161, 8
          %s163 = scalar_lea.vmem %s0, %s162
          %s164 = smul.u32 16, %s13
        $region32: #{tpu_custom_call.1} parent=27 // pred_fallthru
          _
      $region28: #{tpu_custom_call.1} parent=5 // pred_fallthru
        _
      %p165 = scmp.le.s32.totalorder 1, %s13
      %p166 = scmp.lt.s32.totalorder %s13, 3
      %p167 = pnand %p165, %p166
      %p168 = pneg %p167
      // Predicated region
      $region33: #{tpu_custom_call.1} parent=5 // pred_check
        _
      $region34: #{tpu_custom_call.1} parent=5 // pred_check_branch
        %170 = sbr.rel (%p167) target = $region36
      $region35: #{tpu_custom_call.1} parent=5 // pred_region
        %s171 = ssub.s32 %s13, 1
        %s172 = smul.u32 16, %s18
        %p173 = scmp.lt.s32.totalorder %s172, 31
        %s174 = scalar_select %p173, %s172, 31
        %s175 = smul.addr %s174, 8
        %s176 = scalar_lea.vmem %s0, %s175
        %p177 = pneg %p39
        %p178 = pneg %p36
        %p179 = pneg %p60
        %p180 = pneg %p57
        %p181 = pneg %p81
        %p182 = pneg %p78
        %p183 = pneg %p102
        %p184 = pneg %p99
        %p185 = pneg %p128
        %p186 = pneg %p125
        %s187 = sand.u32 %s115, 1
        %s188 = scalar_lea.sflag [#allocation3], %s187
        %s189 = sand.u32 %s115, 1
        %s190 = smul.addr %s189, 64
        %s191 = scalar_lea.vmem [#allocation2], %s190
        %s192 = smul.u32 16, %s18
        %p193 = scmp.lt.s32.totalorder %s192, 31
        %s194 = scalar_select %p193, %s192, 31
        %s195 = smul.addr %s194, 8
        %s196 = scalar_lea.vmem %s0, %s195
        %s197 = smul.u32 16, %s18
        %s198 = smul.u32 16, %s18
        %v200 = vld [vmem:[%s196] sm:$0xff]
        %v201 = vld [vmem:[%s196 + $0x8] sm:$0xff]
        %v202 = vld [vmem:[%s196 + $0x10] sm:$0xff]
        %v203 = vld [vmem:[%s196 + $0x18] sm:$0xff]
        %v204 = vld [vmem:[%s196 + $0x20] sm:$0xff]
        %v205 = vld [vmem:[%s196 + $0x28] sm:$0xff]
        %v206 = vld [vmem:[%s196 + $0x30] sm:$0xff]
        %v207 = vld [vmem:[%s196 + $0x38] sm:$0xff]
        %v208 = vld [vmem:[%s196 + $0x40] sm:$0xff]
        %v209 = vld [vmem:[%s196 + $0x48] sm:$0xff]
        %v210 = vld [vmem:[%s196 + $0x50] sm:$0xff]
        %v211 = vld [vmem:[%s196 + $0x58] sm:$0xff]
        %v212 = vld [vmem:[%s196 + $0x60] sm:$0xff]
        %v213 = vld [vmem:[%s196 + $0x68] sm:$0xff]
        %v214 = vld [vmem:[%s196 + $0x70] sm:$0xff]
        %v215 = vld [vmem:[%s196 + $0x78] sm:$0xff]
        %vm216 = vcmask 982016
        %v217 = vsel %vm216, %v200, 0.0
        %218 = vadd.xlane.f32.xlu0 %v217
        %v219 = vpop.xlane.xlu0 %218
        %v220 = vsel %vm216, %v201, 0.0
        %221 = vadd.xlane.f32.xlu0 %v220
        %v222 = vpop.xlane.xlu0 %221
        %v223 = vsel %vm216, %v202, 0.0
        %224 = vadd.xlane.f32.xlu0 %v223
        %v225 = vpop.xlane.xlu0 %224
        %v226 = vsel %vm216, %v203, 0.0
        %227 = vadd.xlane.f32.xlu0 %v226
        %v228 = vpop.xlane.xlu0 %227
        %v229 = vsel %vm216, %v204, 0.0
        %230 = vadd.xlane.f32.xlu0 %v229
        %v231 = vpop.xlane.xlu0 %230
        %v232 = vsel %vm216, %v205, 0.0
        %233 = vadd.xlane.f32.xlu0 %v232
        %v234 = vpop.xlane.xlu0 %233
        %v235 = vsel %vm216, %v206, 0.0
        %236 = vadd.xlane.f32.xlu0 %v235
        %v237 = vpop.xlane.xlu0 %236
        %v238 = vsel %vm216, %v207, 0.0
        %239 = vadd.xlane.f32.xlu0 %v238
        %v240 = vpop.xlane.xlu0 %239
        %v241 = vsel %vm216, %v208, 0.0
        %242 = vadd.xlane.f32.xlu0 %v241
        %v243 = vpop.xlane.xlu0 %242
        %v244 = vsel %vm216, %v209, 0.0
        %245 = vadd.xlane.f32.xlu0 %v244
        %v246 = vpop.xlane.xlu0 %245
        %v247 = vsel %vm216, %v210, 0.0
        %248 = vadd.xlane.f32.xlu0 %v247
        %v249 = vpop.xlane.xlu0 %248
        %v250 = vsel %vm216, %v211, 0.0
        %251 = vadd.xlane.f32.xlu0 %v250
        %v252 = vpop.xlane.xlu0 %251
        %v253 = vsel %vm216, %v212, 0.0
        %254 = vadd.xlane.f32.xlu0 %v253
        %v255 = vpop.xlane.xlu0 %254
        %v256 = vsel %vm216, %v213, 0.0
        %257 = vadd.xlane.f32.xlu0 %v256
        %v258 = vpop.xlane.xlu0 %257
        %v259 = vsel %vm216, %v214, 0.0
        %260 = vadd.xlane.f32.xlu0 %v259
        %v261 = vpop.xlane.xlu0 %260
        %v262 = vsel %vm216, %v215, 0.0
        %263 = vadd.xlane.f32.xlu0 %v262
        %v264 = vpop.xlane.xlu0 %263
        %v265 = vrcp.pop 120.0
        %v266 = vmul.f32 %v219, %v265
        %v267 = vmul.f32 %v222, %v265
        %v268 = vmul.f32 %v225, %v265
        %v269 = vmul.f32 %v228, %v265
        %v270 = vmul.f32 %v231, %v265
        %v271 = vmul.f32 %v234, %v265
        %v272 = vmul.f32 %v237, %v265
        %v273 = vmul.f32 %v240, %v265
        %v274 = vmul.f32 %v243, %v265
        %v275 = vmul.f32 %v246, %v265
        %v276 = vmul.f32 %v249, %v265
        %v277 = vmul.f32 %v252, %v265
        %v278 = vmul.f32 %v255, %v265
        %v279 = vmul.f32 %v258, %v265
        %v280 = vmul.f32 %v261, %v265
        %v281 = vmul.f32 %v264, %v265
        %v282 = vsub.f32 %v200, %v266
        %v283 = vsub.f32 %v201, %v267
        %v284 = vsub.f32 %v202, %v268
        %v285 = vsub.f32 %v203, %v269
        %v286 = vsub.f32 %v204, %v270
        %v287 = vsub.f32 %v205, %v271
        %v288 = vsub.f32 %v206, %v272
        %v289 = vsub.f32 %v207, %v273
        %v290 = vsub.f32 %v208, %v274
        %v291 = vsub.f32 %v209, %v275
        %v292 = vsub.f32 %v210, %v276
        %v293 = vsub.f32 %v211, %v277
        %v294 = vsub.f32 %v212, %v278
        %v295 = vsub.f32 %v213, %v279
        %v296 = vsub.f32 %v214, %v280
        %v297 = vsub.f32 %v215, %v281
        %v298 = vmul.f32 %v282, %v282
        %v299 = vmul.f32 %v283, %v283
        %v300 = vmul.f32 %v284, %v284
        %v301 = vmul.f32 %v285, %v285
        %v302 = vmul.f32 %v286, %v286
        %v303 = vmul.f32 %v287, %v287
        %v304 = vmul.f32 %v288, %v288
        %v305 = vmul.f32 %v289, %v289
        %v306 = vmul.f32 %v290, %v290
        %v307 = vmul.f32 %v291, %v291
        %v308 = vmul.f32 %v292, %v292
        %v309 = vmul.f32 %v293, %v293
        %v310 = vmul.f32 %v294, %v294
        %v311 = vmul.f32 %v295, %v295
        %v312 = vmul.f32 %v296, %v296
        %v313 = vmul.f32 %v297, %v297
        %v314 = vsel %vm216, %v298, 0.0
        %315 = vadd.xlane.f32.xlu0 %v314
        %v316 = vpop.xlane.xlu0 %315
        %v317 = vsel %vm216, %v299, 0.0
        %318 = vadd.xlane.f32.xlu0 %v317
        %v319 = vpop.xlane.xlu0 %318
        %v320 = vsel %vm216, %v300, 0.0
        %321 = vadd.xlane.f32.xlu0 %v320
        %v322 = vpop.xlane.xlu0 %321
        %v323 = vsel %vm216, %v301, 0.0
        %324 = vadd.xlane.f32.xlu0 %v323
        %v325 = vpop.xlane.xlu0 %324
        %v326 = vsel %vm216, %v302, 0.0
        %327 = vadd.xlane.f32.xlu0 %v326
        %v328 = vpop.xlane.xlu0 %327
        %v329 = vsel %vm216, %v303, 0.0
        %330 = vadd.xlane.f32.xlu0 %v329
        %v331 = vpop.xlane.xlu0 %330
        %v332 = vsel %vm216, %v304, 0.0
        %333 = vadd.xlane.f32.xlu0 %v332
        %v334 = vpop.xlane.xlu0 %333
        %v335 = vsel %vm216, %v305, 0.0
        %336 = vadd.xlane.f32.xlu0 %v335
        %v337 = vpop.xlane.xlu0 %336
        %v338 = vsel %vm216, %v306, 0.0
        %339 = vadd.xlane.f32.xlu0 %v338
        %v340 = vpop.xlane.xlu0 %339
        %v341 = vsel %vm216, %v307, 0.0
        %342 = vadd.xlane.f32.xlu0 %v341
        %v343 = vpop.xlane.xlu0 %342
        %v344 = vsel %vm216, %v308, 0.0
        %345 = vadd.xlane.f32.xlu0 %v344
        %v346 = vpop.xlane.xlu0 %345
        %v347 = vsel %vm216, %v309, 0.0
        %348 = vadd.xlane.f32.xlu0 %v347
        %v349 = vpop.xlane.xlu0 %348
        %v350 = vsel %vm216, %v310, 0.0
        %351 = vadd.xlane.f32.xlu0 %v350
        %v352 = vpop.xlane.xlu0 %351
        %v353 = vsel %vm216, %v311, 0.0
        %354 = vadd.xlane.f32.xlu0 %v353
        %v355 = vpop.xlane.xlu0 %354
        %v356 = vsel %vm216, %v312, 0.0
        %357 = vadd.xlane.f32.xlu0 %v356
        %v358 = vpop.xlane.xlu0 %357
        %v359 = vsel %vm216, %v313, 0.0
        %360 = vadd.xlane.f32.xlu0 %v359
        %v361 = vpop.xlane.xlu0 %360
        %v362 = vmul.f32 %v316, %v265
        %v363 = vmul.f32 %v319, %v265
        %v364 = vmul.f32 %v322, %v265
        %v365 = vmul.f32 %v325, %v265
        %v366 = vmul.f32 %v328, %v265
        %v367 = vmul.f32 %v331, %v265
        %v368 = vmul.f32 %v334, %v265
        %v369 = vmul.f32 %v337, %v265
        %v370 = vmul.f32 %v340, %v265
        %v371 = vmul.f32 %v343, %v265
        %v372 = vmul.f32 %v346, %v265
        %v373 = vmul.f32 %v349, %v265
        %v374 = vmul.f32 %v352, %v265
        %v375 = vmul.f32 %v355, %v265
        %v376 = vmul.f32 %v358, %v265
        %v377 = vmul.f32 %v361, %v265
        %v378 = vadd.f32 %v362, 1e-05
        %v379 = vadd.f32 %v363, 1e-05
        %v380 = vadd.f32 %v364, 1e-05
        %v381 = vadd.f32 %v365, 1e-05
        %v382 = vadd.f32 %v366, 1e-05
        %v383 = vadd.f32 %v367, 1e-05
        %v384 = vadd.f32 %v368, 1e-05
        %v385 = vadd.f32 %v369, 1e-05
        %v386 = vadd.f32 %v370, 1e-05
        %v387 = vadd.f32 %v371, 1e-05
        %v388 = vadd.f32 %v372, 1e-05
        %v389 = vadd.f32 %v373, 1e-05
        %v390 = vadd.f32 %v374, 1e-05
        %v391 = vadd.f32 %v375, 1e-05
        %v392 = vadd.f32 %v376, 1e-05
        %v393 = vadd.f32 %v377, 1e-05
        %v394 = vrsqrt.pop %v378
        %v395 = vrsqrt.pop %v379
        %v396 = vrsqrt.pop %v380
        %v397 = vrsqrt.pop %v381
        %v398 = vrsqrt.pop %v382
        %v399 = vrsqrt.pop %v383
        %v400 = vrsqrt.pop %v384
        %v401 = vrsqrt.pop %v385
        %v402 = vrsqrt.pop %v386
        %v403 = vrsqrt.pop %v387
        %v404 = vrsqrt.pop %v388
        %v405 = vrsqrt.pop %v389
        %v406 = vrsqrt.pop %v390
        %v407 = vrsqrt.pop %v391
        %v408 = vrsqrt.pop %v392
        %v409 = vrsqrt.pop %v393
        %v410 = vmul.f32 %v282, %v394
        %v411 = vmul.f32 %v283, %v395
        %v412 = vmul.f32 %v284, %v396
        %v413 = vmul.f32 %v285, %v397
        %v414 = vmul.f32 %v286, %v398
        %v415 = vmul.f32 %v287, %v399
        %v416 = vmul.f32 %v288, %v400
        %v417 = vmul.f32 %v289, %v401
        %v418 = vmul.f32 %v290, %v402
        %v419 = vmul.f32 %v291, %v403
        %v420 = vmul.f32 %v292, %v404
        %v421 = vmul.f32 %v293, %v405
        %v422 = vmul.f32 %v294, %v406
        %v423 = vmul.f32 %v295, %v407
        %v424 = vmul.f32 %v296, %v408
        %v425 = vmul.f32 %v297, %v409
        %v426 = vpack.c.bf16 %v411, %v410
        %v427 = vpack.c.bf16 %v413, %v412
        %v428 = vpack.c.bf16 %v415, %v414
        %v429 = vpack.c.bf16 %v417, %v416
        %v430 = vpack.c.bf16 %v419, %v418
        %v431 = vpack.c.bf16 %v421, %v420
        %v432 = vpack.c.bf16 %v423, %v422
        %v433 = vpack.c.bf16 %v425, %v424
        %v434 = vld [vmem:[%s1] sm:$0xf]
        %v435 = vld [vmem:[%s1 + $0x4] sm:$0xf]
        %v436 = vld [vmem:[%s1 + $0x8] sm:$0xf]
        %v437 = vld [vmem:[%s1 + $0xc] sm:$0xf]
        %v438 = vld [vmem:[%s1 + $0x10] sm:$0xf]
        %v439 = vld [vmem:[%s1 + $0x14] sm:$0xf]
        %v440 = vld [vmem:[%s1 + $0x18] sm:$0xf]
        %v441 = vld [vmem:[%s1 + $0x1c] sm:$0xf]
        %v442 = vld [vmem:[%s1 + $0x20] sm:$0xf]
        %v443 = vld [vmem:[%s1 + $0x24] sm:$0xf]
        %v444 = vld [vmem:[%s1 + $0x28] sm:$0xf]
        %v445 = vld [vmem:[%s1 + $0x2c] sm:$0xf]
        %v446 = vld [vmem:[%s1 + $0x30] sm:$0xf]
        %v447 = vld [vmem:[%s1 + $0x34] sm:$0xf]
        %v448 = vld [vmem:[%s1 + $0x38] sm:$0xf]
        %v449 = vld [vmem:[%s2] sm:$0x1]
        %v451 = vlaneseq
        %v452 = vshrl.u32 %v451, 7
        %v453 = vsub.s32 0, %v452
        %v454 = vrot.slane %v449, %v453
        %v471 = vunpack.c.l.b16 %v434
        %v472 = vunpack.c.l.b16 %v435
        %v473 = vunpack.c.l.b16 %v436
        %v474 = vunpack.c.l.b16 %v437
        %v475 = vunpack.c.l.b16 %v438
        %v476 = vunpack.c.l.b16 %v439
        %v477 = vunpack.c.l.b16 %v440
        %v478 = vunpack.c.l.b16 %v441
        %v479 = vunpack.c.l.b16 %v442
        %v480 = vunpack.c.l.b16 %v443
        %v481 = vunpack.c.l.b16 %v444
        %v482 = vunpack.c.l.b16 %v445
        %v483 = vunpack.c.l.b16 %v446
        %v484 = vunpack.c.l.b16 %v447
        %v485 = vunpack.c.l.b16 %v448
        %v486 = vpack.c.b16 %v472, %v471
        %v487 = vpack.c.b16 %v474, %v473
        %v488 = vpack.c.b16 %v476, %v475
        %v489 = vpack.c.b16 %v478, %v477
        %v490 = vpack.c.b16 %v480, %v479
        %v491 = vpack.c.b16 %v482, %v481
        %v492 = vpack.c.b16 %v484, %v483
        %v493 = vpack.c.b16 %v485, %v485
        %v502 = vsel %vm216, %v426, 0
        %v505 = vsel %vm216, %v427, 0
        %v508 = vsel %vm216, %v428, 0
        %v511 = vsel %vm216, %v429, 0
        %v514 = vsel %vm216, %v430, 0
        %v517 = vsel %vm216, %v431, 0
        %v520 = vsel %vm216, %v432, 0
        %v523 = vsel %vm216, %v433, 0
        %vm525 = vcmask 1043456
        %v527 = vsel %vm525, %v493, 0
        %529 = vmatprep.subr.bf16.mxu0 0
        %530 = vmatpush1.bf16.msra.mxu0 %v527
        %531 = vmatprep.subr.bf16.mxu0 0
        %532 = vmatpush1.bf16.msra.mxu0 %v492
        %533 = vmatprep.subr.bf16.mxu0 0
        %534 = vmatpush1.bf16.msra.mxu0 %v491
        %535 = vmatprep.subr.bf16.mxu0 0
        %536 = vmatpush1.bf16.msra.mxu0 %v490
        %537 = vmatprep.subr.bf16.mxu0 0
        %538 = vmatpush1.bf16.msra.mxu0 %v489
        %539 = vmatprep.subr.bf16.mxu0 0
        %540 = vmatpush1.bf16.msra.mxu0 %v488
        %541 = vmatprep.subr.bf16.mxu0 0
        %542 = vmatpush1.bf16.msra.mxu0 %v487
        %543 = vmatprep.subr.bf16.mxu0 0
        %544 = vmatpush1.bf16.msra.mxu0 %v486
        %545 = vmatprep.subr.bf16.mxu0 0
        %546 = vmatpush2.bf16.msra.mxu0 0
        %547 = vmatprep.subr.bf16.mxu0 0
        %548 = vmatpush2.bf16.msra.mxu0 0
        %549 = vmatprep.subr.bf16.mxu0 0
        %550 = vmatpush2.bf16.msra.mxu0 0
        %551 = vmatprep.subr.bf16.mxu0 0
        %552 = vmatpush2.bf16.msra.mxu0 0
        %553 = vmatprep.subr.bf16.mxu0 0
        %554 = vmatpush2.bf16.msra.mxu0 0
        %555 = vmatprep.subr.bf16.mxu0 0
        %556 = vmatpush2.bf16.msra.mxu0 0
        %557 = vmatprep.subr.bf16.mxu0 0
        %558 = vmatpush2.bf16.msra.mxu0 0
        %559 = vmatprep.subr.bf16.mxu0 0
        %560 = vmatpush2.bf16.msra.mxu0 0
        %561 = vmatprep.mubr.bf16.mxu0 0
        %562 = vmatmul.mubr.bf16.gmra.mxu0 %v502
        %v563 = vpop.f32.mrf.mxu0
        %v564 = vadd.f32 %v454, %v563
        %v565 = vpop.f32.mrf.mxu0
        %v566 = vpop.f32.mrf.mxu0
        %v567 = vadd.f32 %v454, %v566
        %v568 = vpop.f32.mrf.mxu0
        %569 = vmatprep.mubr.bf16.mxu0 0
        %570 = vmatmul.mubr.bf16.gmra.mxu0 %v505
        %v571 = vpop.f32.mrf.mxu0
        %v572 = vadd.f32 %v454, %v571
        %v573 = vpop.f32.mrf.mxu0
        %v574 = vpop.f32.mrf.mxu0
        %v575 = vadd.f32 %v454, %v574
        %v576 = vpop.f32.mrf.mxu0
        %577 = vmatprep.mubr.bf16.mxu0 0
        %578 = vmatmul.mubr.bf16.gmra.mxu0 %v508
        %v579 = vpop.f32.mrf.mxu0
        %v580 = vadd.f32 %v454, %v579
        %v581 = vpop.f32.mrf.mxu0
        %v582 = vpop.f32.mrf.mxu0
        %v583 = vadd.f32 %v454, %v582
        %v584 = vpop.f32.mrf.mxu0
        %585 = vmatprep.mubr.bf16.mxu0 0
        %586 = vmatmul.mubr.bf16.gmra.mxu0 %v511
        %v587 = vpop.f32.mrf.mxu0
        %v588 = vadd.f32 %v454, %v587
        %v589 = vpop.f32.mrf.mxu0
        %v590 = vpop.f32.mrf.mxu0
        %v591 = vadd.f32 %v454, %v590
        %v592 = vpop.f32.mrf.mxu0
        %593 = vmatprep.mubr.bf16.mxu0 0
        %594 = vmatmul.mubr.bf16.gmra.mxu0 %v514
        %v595 = vpop.f32.mrf.mxu0
        %v596 = vadd.f32 %v454, %v595
        %v597 = vpop.f32.mrf.mxu0
        %v598 = vpop.f32.mrf.mxu0
        %v599 = vadd.f32 %v454, %v598
        %v600 = vpop.f32.mrf.mxu0
        %601 = vmatprep.mubr.bf16.mxu0 0
        %602 = vmatmul.mubr.bf16.gmra.mxu0 %v517
        %v603 = vpop.f32.mrf.mxu0
        %v604 = vadd.f32 %v454, %v603
        %v605 = vpop.f32.mrf.mxu0
        %v606 = vpop.f32.mrf.mxu0
        %v607 = vadd.f32 %v454, %v606
        %v608 = vpop.f32.mrf.mxu0
        %609 = vmatprep.mubr.bf16.mxu0 0
        %610 = vmatmul.mubr.bf16.gmra.mxu0 %v520
        %v611 = vpop.f32.mrf.mxu0
        %v612 = vadd.f32 %v454, %v611
        %v613 = vpop.f32.mrf.mxu0
        %v614 = vpop.f32.mrf.mxu0
        %v615 = vadd.f32 %v454, %v614
        %v616 = vpop.f32.mrf.mxu0
        %617 = vmatprep.mubr.bf16.mxu0 0
        %618 = vmatmul.mubr.bf16.gmra.mxu0 %v523
        %v619 = vpop.f32.mrf.mxu0
        %v620 = vadd.f32 %v454, %v619
        %v621 = vpop.f32.mrf.mxu0
        %v622 = vpop.f32.mrf.mxu0
        %v623 = vadd.f32 %v454, %v622
        %v624 = vpop.f32.mrf.mxu0
        %625 = vdwg.mxu0
        %v626 = vmul.f32 %v564, %v564
        %v627 = vmul.f32 %v567, %v567
        %v628 = vmul.f32 %v572, %v572
        %v629 = vmul.f32 %v575, %v575
        %v630 = vmul.f32 %v580, %v580
        %v631 = vmul.f32 %v583, %v583
        %v632 = vmul.f32 %v588, %v588
        %v633 = vmul.f32 %v591, %v591
        %v634 = vmul.f32 %v596, %v596
        %v635 = vmul.f32 %v599, %v599
        %v636 = vmul.f32 %v604, %v604
        %v637 = vmul.f32 %v607, %v607
        %v638 = vmul.f32 %v612, %v612
        %v639 = vmul.f32 %v615, %v615
        %v640 = vmul.f32 %v620, %v620
        %v641 = vmul.f32 %v623, %v623
        %v642 = vpack.c.bf16 %v627, %v626
        %v643 = vpack.c.bf16 %v629, %v628
        %v644 = vpack.c.bf16 %v631, %v630
        %v645 = vpack.c.bf16 %v633, %v632
        %v646 = vpack.c.bf16 %v635, %v634
        %v647 = vpack.c.bf16 %v637, %v636
        %v648 = vpack.c.bf16 %v639, %v638
        %v649 = vpack.c.bf16 %v641, %v640
        %v650 = vld [vmem:[%s3] sm:$0xf]
        %v651 = vld [vmem:[%s3 + $0x4] sm:$0xf]
        %v652 = vld [vmem:[%s3 + $0x8] sm:$0xf]
        %v653 = vld [vmem:[%s3 + $0xc] sm:$0xf]
        %v654 = vld [vmem:[%s3 + $0x10] sm:$0xf]
        %v655 = vld [vmem:[%s3 + $0x14] sm:$0xf]
        %v656 = vld [vmem:[%s3 + $0x18] sm:$0xf]
        %v657 = vld [vmem:[%s3 + $0x1c] sm:$0xf]
        %v658 = vld [vmem:[%s3 + $0x20] sm:$0xf]
        %v659 = vld [vmem:[%s3 + $0x24] sm:$0xf]
        %v660 = vld [vmem:[%s3 + $0x28] sm:$0xf]
        %v661 = vld [vmem:[%s3 + $0x2c] sm:$0xf]
        %v662 = vld [vmem:[%s3 + $0x30] sm:$0xf]
        %v663 = vld [vmem:[%s3 + $0x34] sm:$0xf]
        %v664 = vld [vmem:[%s3 + $0x38] sm:$0xf]
        %v665 = vld [vmem:[%s3 + $0x3c] sm:$0xf]
        %v682 = vunpack.c.l.b16 %v650
        %v683 = vunpack.c.l.b16 %v651
        %v684 = vunpack.c.l.b16 %v652
        %v685 = vunpack.c.l.b16 %v653
        %v686 = vunpack.c.l.b16 %v654
        %v687 = vunpack.c.l.b16 %v655
        %v688 = vunpack.c.l.b16 %v656
        %v689 = vunpack.c.l.b16 %v657
        %v690 = vunpack.c.l.b16 %v658
        %v691 = vunpack.c.l.b16 %v659
        %v692 = vunpack.c.l.b16 %v660
        %v693 = vunpack.c.l.b16 %v661
        %v694 = vunpack.c.l.b16 %v662
        %v695 = vunpack.c.l.b16 %v663
        %v696 = vunpack.c.l.b16 %v664
        %v697 = vunpack.c.l.b16 %v665
        %v698 = vpack.c.b16 %v683, %v682
        %v699 = vpack.c.b16 %v685, %v684
        %v700 = vpack.c.b16 %v687, %v686
        %v701 = vpack.c.b16 %v689, %v688
        %v702 = vpack.c.b16 %v691, %v690
        %v703 = vpack.c.b16 %v693, %v692
        %v704 = vpack.c.b16 %v695, %v694
        %v705 = vpack.c.b16 %v697, %v696
        %714 = vmatprep.subr.bf16.mxu0 0
        %715 = vmatpush1.bf16.msra.mxu0 %v705
        %716 = vmatprep.subr.bf16.mxu0 0
        %717 = vmatpush1.bf16.msra.mxu0 %v704
        %718 = vmatprep.subr.bf16.mxu0 0
        %719 = vmatpush1.bf16.msra.mxu0 %v703
        %720 = vmatprep.subr.bf16.mxu0 0
        %721 = vmatpush1.bf16.msra.mxu0 %v702
        %722 = vmatprep.subr.bf16.mxu0 0
        %723 = vmatpush1.bf16.msra.mxu0 %v701
        %724 = vmatprep.subr.bf16.mxu0 0
        %725 = vmatpush1.bf16.msra.mxu0 %v700
        %726 = vmatprep.subr.bf16.mxu0 0
        %727 = vmatpush1.bf16.msra.mxu0 %v699
        %728 = vmatprep.subr.bf16.mxu0 0
        %729 = vmatpush1.bf16.msra.mxu0 %v698
        %730 = vmatprep.subr.bf16.mxu0 0
        %731 = vmatpush2.bf16.msra.mxu0 0
        %732 = vmatprep.subr.bf16.mxu0 0
        %733 = vmatpush2.bf16.msra.mxu0 0
        %734 = vmatprep.subr.bf16.mxu0 0
        %735 = vmatpush2.bf16.msra.mxu0 0
        %736 = vmatprep.subr.bf16.mxu0 0
        %737 = vmatpush2.bf16.msra.mxu0 0
        %738 = vmatprep.subr.bf16.mxu0 0
        %739 = vmatpush2.bf16.msra.mxu0 0
        %740 = vmatprep.subr.bf16.mxu0 0
        %741 = vmatpush2.bf16.msra.mxu0 0
        %742 = vmatprep.subr.bf16.mxu0 0
        %743 = vmatpush2.bf16.msra.mxu0 0
        %744 = vmatprep.subr.bf16.mxu0 0
        %745 = vmatpush2.bf16.msra.mxu0 0
        %746 = vmatprep.mubr.bf16.mxu0 0
        %747 = vmatmul.mubr.bf16.gmra.mxu0 %v642
        %v748 = vpop.f32.mrf.mxu0
        %v749 = vadd.f32 1e-05, %v748
        %v750 = vpop.f32.mrf.mxu0
        %v751 = vpop.f32.mrf.mxu0
        %v752 = vadd.f32 1e-05, %v751
        %v753 = vpop.f32.mrf.mxu0
        %754 = vmatprep.mubr.bf16.mxu0 0
        %755 = vmatmul.mubr.bf16.gmra.mxu0 %v643
        %v756 = vpop.f32.mrf.mxu0
        %v757 = vadd.f32 1e-05, %v756
        %v758 = vpop.f32.mrf.mxu0
        %v759 = vpop.f32.mrf.mxu0
        %v760 = vadd.f32 1e-05, %v759
        %v761 = vpop.f32.mrf.mxu0
        %762 = vmatprep.mubr.bf16.mxu0 0
        %763 = vmatmul.mubr.bf16.gmra.mxu0 %v644
        %v764 = vpop.f32.mrf.mxu0
        %v765 = vadd.f32 1e-05, %v764
        %v766 = vpop.f32.mrf.mxu0
        %v767 = vpop.f32.mrf.mxu0
        %v768 = vadd.f32 1e-05, %v767
        %v769 = vpop.f32.mrf.mxu0
        %770 = vmatprep.mubr.bf16.mxu0 0
        %771 = vmatmul.mubr.bf16.gmra.mxu0 %v645
        %v772 = vpop.f32.mrf.mxu0
        %v773 = vadd.f32 1e-05, %v772
        %v774 = vpop.f32.mrf.mxu0
        %v775 = vpop.f32.mrf.mxu0
        %v776 = vadd.f32 1e-05, %v775
        %v777 = vpop.f32.mrf.mxu0
        %778 = vmatprep.mubr.bf16.mxu0 0
        %779 = vmatmul.mubr.bf16.gmra.mxu0 %v646
        %v780 = vpop.f32.mrf.mxu0
        %v781 = vadd.f32 1e-05, %v780
        %v782 = vpop.f32.mrf.mxu0
        %v783 = vpop.f32.mrf.mxu0
        %v784 = vadd.f32 1e-05, %v783
        %v785 = vpop.f32.mrf.mxu0
        %786 = vmatprep.mubr.bf16.mxu0 0
        %787 = vmatmul.mubr.bf16.gmra.mxu0 %v647
        %v788 = vpop.f32.mrf.mxu0
        %v789 = vadd.f32 1e-05, %v788
        %v790 = vpop.f32.mrf.mxu0
        %v791 = vpop.f32.mrf.mxu0
        %v792 = vadd.f32 1e-05, %v791
        %v793 = vpop.f32.mrf.mxu0
        %794 = vmatprep.mubr.bf16.mxu0 0
        %795 = vmatmul.mubr.bf16.gmra.mxu0 %v648
        %v796 = vpop.f32.mrf.mxu0
        %v797 = vadd.f32 1e-05, %v796
        %v798 = vpop.f32.mrf.mxu0
        %v799 = vpop.f32.mrf.mxu0
        %v800 = vadd.f32 1e-05, %v799
        %v801 = vpop.f32.mrf.mxu0
        %802 = vmatprep.mubr.bf16.mxu0 0
        %803 = vmatmul.mubr.bf16.gmra.mxu0 %v649
        %v804 = vpop.f32.mrf.mxu0
        %v805 = vadd.f32 1e-05, %v804
        %v806 = vpop.f32.mrf.mxu0
        %v807 = vpop.f32.mrf.mxu0
        %v808 = vadd.f32 1e-05, %v807
        %v809 = vpop.f32.mrf.mxu0
        %810 = vdwg.mxu0
        %v811 = vrsqrt.pop %v749
        %v812 = vrsqrt.pop %v752
        %v813 = vrsqrt.pop %v757
        %v814 = vrsqrt.pop %v760
        %v815 = vrsqrt.pop %v765
        %v816 = vrsqrt.pop %v768
        %v817 = vrsqrt.pop %v773
        %v818 = vrsqrt.pop %v776
        %v819 = vrsqrt.pop %v781
        %v820 = vrsqrt.pop %v784
        %v821 = vrsqrt.pop %v789
        %v822 = vrsqrt.pop %v792
        %v823 = vrsqrt.pop %v797
        %v824 = vrsqrt.pop %v800
        %v825 = vrsqrt.pop %v805
        %v826 = vrsqrt.pop %v808
        %v827 = vmul.f32 %v564, %v811
        %v828 = vmul.f32 %v567, %v812
        %v829 = vmul.f32 %v572, %v813
        %v830 = vmul.f32 %v575, %v814
        %v831 = vmul.f32 %v580, %v815
        %v832 = vmul.f32 %v583, %v816
        %v833 = vmul.f32 %v588, %v817
        %v834 = vmul.f32 %v591, %v818
        %v835 = vmul.f32 %v596, %v819
        %v836 = vmul.f32 %v599, %v820
        %v837 = vmul.f32 %v604, %v821
        %v838 = vmul.f32 %v607, %v822
        %v839 = vmul.f32 %v612, %v823
        %v840 = vmul.f32 %v615, %v824
        %v841 = vmul.f32 %v620, %v825
        %v842 = vmul.f32 %v623, %v826
        %v843 = vpack.c.bf16 %v828, %v827
        %v844 = vpack.c.bf16 %v830, %v829
        %v845 = vpack.c.bf16 %v832, %v831
        %v846 = vpack.c.bf16 %v834, %v833
        %v847 = vpack.c.bf16 %v836, %v835
        %v848 = vpack.c.bf16 %v838, %v837
        %v849 = vpack.c.bf16 %v840, %v839
        %v850 = vpack.c.bf16 %v842, %v841
        %v859 = vunpack.c.l.b16 %v843
        %v860 = vunpack.c.h.b16 %v843
        %v861 = vunpack.c.l.b16 %v844
        %v862 = vunpack.c.h.b16 %v844
        %v863 = vunpack.c.l.b16 %v845
        %v864 = vunpack.c.h.b16 %v845
        %v865 = vunpack.c.l.b16 %v846
        %v866 = vunpack.c.h.b16 %v846
        %v867 = vunpack.c.l.b16 %v847
        %v868 = vunpack.c.h.b16 %v847
        %v869 = vunpack.c.l.b16 %v848
        %v870 = vunpack.c.h.b16 %v848
        %v871 = vunpack.c.l.b16 %v849
        %v872 = vunpack.c.h.b16 %v849
        %v873 = vunpack.c.l.b16 %v850
        %v874 = vunpack.c.h.b16 %v850
        %v875 = vpack.c.b16 %v859, %v859
        %v876 = vpack.c.b16 %v860, %v860
        %v877 = vpack.c.b16 %v861, %v861
        %v878 = vpack.c.b16 %v862, %v862
        %v879 = vpack.c.b16 %v863, %v863
        %v880 = vpack.c.b16 %v864, %v864
        %v881 = vpack.c.b16 %v865, %v865
        %v882 = vpack.c.b16 %v866, %v866
        %v883 = vpack.c.b16 %v867, %v867
        %v884 = vpack.c.b16 %v868, %v868
        %v885 = vpack.c.b16 %v869, %v869
        %v886 = vpack.c.b16 %v870, %v870
        %v887 = vpack.c.b16 %v871, %v871
        %v888 = vpack.c.b16 %v872, %v872
        %v889 = vpack.c.b16 %v873, %v873
        %v890 = vpack.c.b16 %v874, %v874
        %907 = vst [vmem:[%s191] sm:$0xf] %v875
        %908 = vst [vmem:[%s191 + $0x4] sm:$0xf] %v876
        %909 = vst [vmem:[%s191 + $0x8] sm:$0xf] %v877
        %910 = vst [vmem:[%s191 + $0xc] sm:$0xf] %v878
        %911 = vst [vmem:[%s191 + $0x10] sm:$0xf] %v879
        %912 = vst [vmem:[%s191 + $0x14] sm:$0xf] %v880
        %913 = vst [vmem:[%s191 + $0x18] sm:$0xf] %v881
        %914 = vst [vmem:[%s191 + $0x1c] sm:$0xf] %v882
        %915 = vst [vmem:[%s191 + $0x20] sm:$0xf] %v883
        %916 = vst [vmem:[%s191 + $0x24] sm:$0xf] %v884
        %917 = vst [vmem:[%s191 + $0x28] sm:$0xf] %v885
        %918 = vst [vmem:[%s191 + $0x2c] sm:$0xf] %v886
        %919 = vst [vmem:[%s191 + $0x30] sm:$0xf] %v887
        %920 = vst [vmem:[%s191 + $0x34] sm:$0xf] %v888
        %921 = vst [vmem:[%s191 + $0x38] sm:$0xf] %v889
        %922 = vst [vmem:[%s191 + $0x3c] sm:$0xf] %v890
        %s923 = sand.u32 %s115, 1
        %s924 = scalar_lea.sflag [#allocation3], %s923
        %s925 = sand.u32 %s115, 1
        %s926 = smul.addr %s925, 64
        %s927 = scalar_lea.vmem [#allocation2], %s926
        // Predicated region
        $region37: #{tpu_custom_call.1} parent=35 // pred_check
          %p928 = pneg %p125
        $region38: #{tpu_custom_call.1} parent=35 // pred_check_branch
          %930 = sbr.rel (%p928) target = $region40
        $region39: #{tpu_custom_call.1} parent=35 // pred_region
          %s931 = smul.u32 16, %s18
          %s933 = ssub.s32 1024, 1024
          %934 = vsyncadd %s924, %s933
          %s935 = smul.addr %s931, 64
          %s936 = scalar_lea.hbm %s4, %s935
          %s937 = sshll.u32 %s927, 4
          %s938 = int_to_ptr.vmem [resolvable:$true] %s937
          %943 = dma.vmem_to_hbm [thread:$0]  %s938, 1024, %s936, %s924, 64, 64, 4
        $region40: #{tpu_custom_call.1} parent=35 // pred_fallthru
          _
      $region36: #{tpu_custom_call.1} parent=5 // pred_fallthru
        _
      %p944 = scmp.le.s32.totalorder 2, %s13
      // Predicated region
      $region41: #{tpu_custom_call.1} parent=5 // pred_check
        %p945 = pneg %p944
      $region42: #{tpu_custom_call.1} parent=5 // pred_check_branch
        %947 = sbr.rel (%p945) target = $region44
      $region43: #{tpu_custom_call.1} parent=5 // pred_region
        %s948 = ssub.s32 %s13, 2
        // Predicated region
        $region45: #{tpu_custom_call.1} parent=43 // pred_check
          %p949 = pneg %p131
        $region46: #{tpu_custom_call.1} parent=43 // pred_check_branch
          %951 = sbr.rel (%p949) target = $region48
        $region47: #{tpu_custom_call.1} parent=43 // pred_region
          %s952 = sand.u32 %s116, 1
          %s953 = scalar_lea.sflag [#allocation3], %s952
          %s954 = sand.u32 %s116, 1
          %s955 = smul.addr %s954, 64
          %s956 = scalar_lea.vmem [#allocation2], %s955
          %957 = dma.done %s953, 1024
        $region48: #{tpu_custom_call.1} parent=43 // pred_fallthru
          _
      $region44: #{tpu_custom_call.1} parent=5 // pred_fallthru
        _
    $region6: #{tpu_custom_call.1} parent=1 // loop_footer
      %s17 = sadd.s32 1, %s13
    $region7: #{tpu_custom_call.1} parent=1 // loop_footer_branch
      %12 = sbr.rel target = $region3
    $region8: #{tpu_custom_call.1} parent=1 // loop_exit
      _
    %958 = vsyncpa [#allocation3], 1
    %s959 = scalar_lea.sflag [#allocation3], 1
    %960 = vsyncpa %s959, 1

</llo_original>
